<compile_context>
chip_gen: v5e
topology: v5e:2x2
jax: 0.10.0
libtpu: 0.0.40
codegen_flags: <defaults>
</compile_context>

<pallas_src>
import functools

import jax
import jax.numpy as jnp
from jax import lax
from jax.experimental import pallas as pl
from jax.experimental.pallas import tpu as pltpu


def _round_up(a: int, b: int) -> int:
    return (a + b - 1) // b * b


def _l2loss_kernel(x_ref, out_ref, acc_h_ref, acc_w_ref, *,
                   W, L, L_pad, chunk, num_chunks, inv_h_c, inv_w_c):
    s = pl.program_id(0)

    # Init the resident accumulators once, at the first grid step.
    @pl.when(s == 0)
    def _init():
        acc_h_ref[...] = jnp.zeros_like(acc_h_ref)
        acc_w_ref[...] = jnp.zeros_like(acc_w_ref)

    # Stream the plane axis of this block in sublane-aligned chunks so the
    # f32 temporaries stay in a handful of vregs.
    def body(c, carry):
        i = pl.multiple_of(c * chunk, chunk)
        xc = x_ref[pl.ds(i, chunk), :].astype(jnp.float32)      # (chunk, L_pad)
        # Neighbor along W:  x[.., j+1]   (roll by -1  == +(L_pad-1))
        # Neighbor along H:  x[.., j+W]   (roll by -W  == +(L_pad-W))
        xw = pltpu.roll(xc, L_pad - 1, axis=1)
        xh = pltpu.roll(xc, L_pad - W, axis=1)
        dw = xw - xc
        dh = xh - xc
        # Unmasked accumulation (seam positions are zeroed once, at finalize).
        acc_w_ref[...] += dw * dw
        acc_h_ref[...] += dh * dh
        return carry

    lax.fori_loop(0, num_chunks, body, 0, unroll=True)

    # Final grid step: one cross-lane reduce + seam masks + static scaling.
    @pl.when(s == pl.num_programs(0) - 1)
    def _finalize():
        idx = lax.broadcasted_iota(jnp.int32, (chunk, L_pad), 1)
        # H-direction diffs valid for flattened index < (H-1)*W.
        h_mask = (idx < (L - W)).astype(jnp.float32)
        # W-direction diffs valid except at the last column of each image row
        # and in the lane-padding region.
        w_mask = jnp.logical_and(idx % W != (W - 1), idx < L).astype(jnp.float32)
        total = (jnp.sum(acc_h_ref[...] * h_mask) * inv_h_c
                 + jnp.sum(acc_w_ref[...] * w_mask) * inv_w_c)
        out_ref[...] = jnp.reshape(total, (1, 1))


def l2_loss(x: jax.Array, loss_weight: float = 1.0,
            *, target_block_bytes: int = 4 * 1024 * 1024) -> jax.Array:
    """Pallas implementation of SRGAN L2Loss.forward for NCHW input."""
    B, C, H, W = x.shape
    if H < 2 or W < 2:
        # Reference divides by zero (h_c or w_c == 0) in this case.
        raise ValueError("l2_loss requires H >= 2 and W >= 2.")

    N = B * C
    L = H * W
    L_pad = _round_up(L, 128)          # lane-dense, roll-friendly row length
    x2 = x.reshape(N, L)               # free reshape (contiguous)

    # Static normalization constants (match torch calc_size on sliced views).
    h_c = float(C * (H - 1) * W)
    w_c = float(C * H * (W - 1))

    itemsize = jnp.dtype(x.dtype).itemsize
    chunk = 8 * max(1, 4 // itemsize)  # f32: 8 sublanes / vreg, bf16: 16
    row_bytes = L_pad * itemsize

    # Rows per block: fill ~target_block_bytes, multiple of `chunk`, and a
    # divisor of the chunk-padded plane count (padding stays <= chunk-1 rows).
    N_ceil = _round_up(N, chunk)
    budget_rows = max(chunk, target_block_bytes // row_bytes)
    budget_rows = min(budget_rows, N_ceil)
    tile_n = chunk
    for cand in range(chunk, budget_rows + 1, chunk):
        if N_ceil % cand == 0:
            tile_n = cand
    N_pad = N_ceil

    if N_pad != N or L_pad != L:
        # Zero rows/cols contribute nothing (zero diffs) or are masked out.
        x2 = jnp.pad(x2, ((0, N_pad - N), (0, L_pad - L)))

    steps = N_pad // tile_n
    num_chunks = tile_n // chunk

    kernel = functools.partial(
        _l2loss_kernel, W=W, L=L, L_pad=L_pad, chunk=chunk,
        num_chunks=num_chunks, inv_h_c=1.0 / h_c, inv_w_c=1.0 / w_c)

    cost = pl.CostEstimate(
        flops=6 * N_pad * L_pad,       # 2 subs + 2 squares + 2 accum adds / elem
        transcendentals=0,
        bytes_accessed=int(N_pad) * int(L_pad) * itemsize + 4)

    out = pl.pallas_call(
        kernel,
        out_shape=jax.ShapeDtypeStruct((1, 1), jnp.float32),
        grid_spec=pltpu.PrefetchScalarGridSpec(
            num_scalar_prefetch=0,
            grid=(steps,),
            in_specs=[pl.BlockSpec((tile_n, L_pad), lambda s: (s, 0))],
            out_specs=pl.BlockSpec((1, 1), lambda s: (0, 0)),
            scratch_shapes=[pltpu.VMEM((chunk, L_pad), jnp.float32),
                            pltpu.VMEM((chunk, L_pad), jnp.float32)],
        ),
        compiler_params=pltpu.CompilerParams(
            dimension_semantics=("arbitrary",),
            # Double-buffered ~4 MiB blocks + two small accumulators; fits
            # the scoped VMEM of v5e/v6e and v7x's 64 MiB physical VMEM.
            vmem_limit_bytes=32 * 1024 * 1024,
        ),
        cost_estimate=cost,
    )(x2)

    # Tiny finalization in the wrapper: apply 2 * weight / B.
    return (2.0 * float(loss_weight) / float(B)) * out[0, 0]


def _reference_l2_loss(x, loss_weight=1.0):
    x = x.astype(jnp.float32)
    B, C, H, W = x.shape
    h_c = C * (H - 1) * W
    w_c = C * H * (W - 1)
    h_l2 = jnp.sum((x[:, :, 1:, :] - x[:, :, : H - 1, :]) ** 2)
    w_l2 = jnp.sum((x[:, :, :, 1:] - x[:, :, :, : W - 1]) ** 2)
    return loss_weight * 2.0 * (h_l2 / h_c + w_l2 / w_c) / B


if __name__ == "__main__":
    key = jax.random.PRNGKey(0)
    k1, k2, k3, k4 = jax.random.split(key, 4)

    # Primary small NCHW test (matches the module's forward signature).
    x = jax.random.normal(k1, (2, 4, 16, 16), dtype=jnp.float32)
    loss = jax.block_until_ready(l2_loss(x, loss_weight=1.0))
    ref = jax.block_until_ready(_reference_l2_loss(x, loss_weight=1.0))
    assert jnp.allclose(loss, ref, rtol=1e-5, atol=1e-5), (loss, ref)

    # Force several grid steps: exercises init / accumulate / finalize gating.
    x2 = jax.random.normal(k2, (2, 8, 16, 16), dtype=jnp.float32)
    loss2 = jax.block_until_ready(
        l2_loss(x2, loss_weight=0.5, target_block_bytes=8 * 256 * 4))
    ref2 = jax.block_until_ready(_reference_l2_loss(x2, loss_weight=0.5))
    assert jnp.allclose(loss2, ref2, rtol=1e-5, atol=1e-5), (loss2, ref2)

    # Plane count that needs zero-padding (N = 10 -> padded to 16).
    x3 = jax.random.normal(k3, (2, 5, 16, 16), dtype=jnp.float32)
    loss3 = jax.block_until_ready(l2_loss(x3, loss_weight=1.0))
    ref3 = jax.block_until_ready(_reference_l2_loss(x3, loss_weight=1.0))
    assert jnp.allclose(loss3, ref3, rtol=1e-5, atol=1e-5), (loss3, ref3)

    # H*W not a multiple of 128 and non-power-of-two W: exercises the
    # lane-padding + seam-mask path (L = 240 padded to 256, W = 20).
    x4 = jax.random.normal(k4, (2, 2, 12, 20), dtype=jnp.float32)
    loss4 = jax.block_until_ready(l2_loss(x4, loss_weight=2.0))
    ref4 = jax.block_until_ready(_reference_l2_loss(x4, loss_weight=2.0))
    assert jnp.allclose(loss4, ref4, rtol=1e-5, atol=1e-5), (loss4, ref4)

    print("KERNEL_OK")
</pallas_src>

<mosaic_0001>
module attributes {stable_mosaic.version = 11 : i64} {
  func.func @_l2loss_kernel(%arg0: i32, %arg1: memref<8x256xf32, #tpu.memory_space<vmem>>, %arg2: memref<1x1xf32, #tpu.memory_space<vmem>>, %arg3: memref<8x256xf32, #tpu.memory_space<vmem>>, %arg4: memref<8x256xf32, #tpu.memory_space<vmem>>) attributes {dimension_semantics = [#tpu.dimension_semantics<arbitrary>], iteration_bounds = array<i64: 1>, scalar_prefetch = 0 : i64, scratch_operands = 2 : i64, tpu.core_type = #tpu.core_type<tc>, window_params = [{transform_indices = @transform_0, window_bounds = array<i64: 8, 256>}, {pipeline_mode = #tpu.pipeline_mode<synchronous>, transform_indices = @transform_1, window_bounds = array<i64: 1, 1>}]} {
    %c0_i32 = arith.constant 0 : i32
    %0 = arith.cmpi eq, %arg0, %c0_i32 : i32
    %1 = arith.extui %0 : i1 to i32
    %c0_i32_0 = arith.constant 0 : i32
    %2 = arith.cmpi ne, %1, %c0_i32_0 : i32
    scf.if %2 {
      %cst = arith.constant 0.000000e+00 : f32
      %22 = vector.broadcast %cst : f32 to vector<8x256xf32>
      %c0_12 = arith.constant 0 : index
      %c0_13 = arith.constant 0 : index
      %23 = vector.load %arg3[%c0_12, %c0_13] : memref<8x256xf32, #tpu.memory_space<vmem>>, vector<8x256xf32>
      tpu.vector_store %arg3[%c0_12, %c0_13], %22 {strides = array<i32>} : memref<8x256xf32, #tpu.memory_space<vmem>>, vector<8x256xf32>,
      %cst_14 = arith.constant 0.000000e+00 : f32
      %24 = vector.broadcast %cst_14 : f32 to vector<8x256xf32>
      %c0_15 = arith.constant 0 : index
      %c0_16 = arith.constant 0 : index
      %25 = vector.load %arg4[%c0_15, %c0_16] : memref<8x256xf32, #tpu.memory_space<vmem>>, vector<8x256xf32>
      tpu.vector_store %arg4[%c0_15, %c0_16], %24 {strides = array<i32>} : memref<8x256xf32, #tpu.memory_space<vmem>>, vector<8x256xf32>,
    } else {
    }
    %c0_i32_1 = arith.constant 0 : i32
    %c8_i32 = arith.constant 8 : i32
    %3 = arith.muli %c0_i32_1, %c8_i32 : i32
    %4 = tpu.assume_multiple %3, 8 : i32
    %5 = arith.index_cast %4 : i32 to index
    %c0 = arith.constant 0 : index
    %6 = vector.load %arg1[%5, %c0] : memref<8x256xf32, #tpu.memory_space<vmem>>, vector<8x256xf32>
    %c255_i32 = arith.constant 255 : i32
    %7 = tpu.dynamic_rotate %6 by %c255_i32 dim 1 : vector<8x256xf32>, i32 -> vector<8x256xf32>
    %c240_i32 = arith.constant 240 : i32
    %8 = tpu.dynamic_rotate %6 by %c240_i32 dim 1 : vector<8x256xf32>, i32 -> vector<8x256xf32>
    %9 = arith.subf %7, %6 : vector<8x256xf32>
    %10 = arith.subf %8, %6 : vector<8x256xf32>
    %c0_2 = arith.constant 0 : index
    %c0_3 = arith.constant 0 : index
    %11 = vector.load %arg4[%c0_2, %c0_3] : memref<8x256xf32, #tpu.memory_space<vmem>>, vector<8x256xf32>
    %12 = arith.mulf %9, %9 : vector<8x256xf32>
    %13 = arith.addf %11, %12 : vector<8x256xf32>
    %c0_4 = arith.constant 0 : index
    %c0_5 = arith.constant 0 : index
    %14 = vector.load %arg4[%c0_4, %c0_5] : memref<8x256xf32, #tpu.memory_space<vmem>>, vector<8x256xf32>
    tpu.vector_store %arg4[%c0_4, %c0_5], %13 {strides = array<i32>} : memref<8x256xf32, #tpu.memory_space<vmem>>, vector<8x256xf32>,
    %c0_6 = arith.constant 0 : index
    %c0_7 = arith.constant 0 : index
    %15 = vector.load %arg3[%c0_6, %c0_7] : memref<8x256xf32, #tpu.memory_space<vmem>>, vector<8x256xf32>
    %16 = arith.mulf %10, %10 : vector<8x256xf32>
    %17 = arith.addf %15, %16 : vector<8x256xf32>
    %c0_8 = arith.constant 0 : index
    %c0_9 = arith.constant 0 : index
    %18 = vector.load %arg3[%c0_8, %c0_9] : memref<8x256xf32, #tpu.memory_space<vmem>>, vector<8x256xf32>
    tpu.vector_store %arg3[%c0_8, %c0_9], %17 {strides = array<i32>} : memref<8x256xf32, #tpu.memory_space<vmem>>, vector<8x256xf32>,
    %c1_i32 = arith.constant 1 : i32
    %c0_i32_10 = arith.constant 0 : i32
    %19 = arith.cmpi eq, %arg0, %c0_i32_10 : i32
    %20 = arith.extui %19 : i1 to i32
    %c0_i32_11 = arith.constant 0 : i32
    %21 = arith.cmpi ne, %20, %c0_i32_11 : i32
    scf.if %21 {
      %22 = tpu.iota {dimensions = array<i32: 1>} : vector<8x256xi32>
      %c240_i32_12 = arith.constant 240 : i32
      %23 = vector.broadcast %c240_i32_12 : i32 to vector<8x256xi32>
      %24 = arith.cmpi slt, %22, %23 : vector<8x256xi32>
      %25 = arith.extui %24 : vector<8x256xi1> to vector<8x256xi32>
      %26 = arith.sitofp %25 : vector<8x256xi32> to vector<8x256xf32>
      %c16_i32 = arith.constant 16 : i32
      %c0_i32_13 = arith.constant 0 : i32
      %27 = arith.cmpi eq, %c16_i32, %c0_i32_13 : i32
      %c1_i32_14 = arith.constant 1 : i32
      %28 = arith.select %27, %c1_i32_14, %c16_i32 : i32
      %29 = vector.broadcast %28 : i32 to vector<8x256xi32>
      %30 = arith.remsi %22, %29 : vector<8x256xi32>
      %c0_i32_15 = arith.constant 0 : i32
      %31 = vector.broadcast %c0_i32_15 : i32 to vector<8x256xi32>
      %32 = arith.cmpi ne, %30, %31 : vector<8x256xi32>
      %c0_i32_16 = arith.constant 0 : i32
      %33 = vector.broadcast %c0_i32_16 : i32 to vector<8x256xi32>
      %34 = arith.cmpi slt, %30, %33 : vector<8x256xi32>
      %c0_i32_17 = arith.constant 0 : i32
      %35 = arith.cmpi slt, %28, %c0_i32_17 : i32
      %36 = vector.broadcast %35 : i1 to vector<8x256xi1>
      %37 = vector.broadcast %36 : vector<8x256xi1> to vector<8x256xi1>
      %38 = arith.xori %34, %37 : vector<8x256xi1>
      %39 = arith.andi %38, %32 : vector<8x256xi1>
      %40 = vector.broadcast %28 : i32 to vector<8x256xi32>
      %41 = arith.addi %30, %40 : vector<8x256xi32>
      %42 = arith.select %39, %41, %30 : vector<8x256xi1>, vector<8x256xi32>
      %c15_i32 = arith.constant 15 : i32
      %43 = vector.broadcast %c15_i32 : i32 to vector<8x256xi32>
      %44 = arith.cmpi ne, %42, %43 : vector<8x256xi32>
      %c256_i32 = arith.constant 256 : i32
      %45 = vector.broadcast %c256_i32 : i32 to vector<8x256xi32>
      %46 = arith.cmpi slt, %22, %45 : vector<8x256xi32>
      %47 = arith.andi %44, %46 : vector<8x256xi1>
      %48 = arith.extui %47 : vector<8x256xi1> to vector<8x256xi32>
      %49 = arith.sitofp %48 : vector<8x256xi32> to vector<8x256xf32>
      %c0_18 = arith.constant 0 : index
      %c0_19 = arith.constant 0 : index
      %50 = vector.load %arg3[%c0_18, %c0_19] : memref<8x256xf32, #tpu.memory_space<vmem>>, vector<8x256xf32>
      %51 = arith.mulf %50, %26 : vector<8x256xf32>
      %52 = vector.shape_cast %51 : vector<8x256xf32> to vector<1x8x256xf32>
      %cst = arith.constant dense<0.000000e+00> : vector<1xf32>
      %53 = vector.multi_reduction <add>, %52, %cst [1, 2] : vector<1x8x256xf32> to vector<1xf32>
      %54 = vector.shape_cast %53 : vector<1xf32> to vector<1x1x1xf32>
      %55 = vector.extract %54[0, 0, 0] : f32 from vector<1x1x1xf32>
      %cst_20 = arith.constant 0.00104166672 : f32
      %56 = arith.mulf %55, %cst_20 : f32
      %c0_21 = arith.constant 0 : index
      %c0_22 = arith.constant 0 : index
      %57 = vector.load %arg4[%c0_21, %c0_22] : memref<8x256xf32, #tpu.memory_space<vmem>>, vector<8x256xf32>
      %58 = arith.mulf %57, %49 : vector<8x256xf32>
      %59 = vector.shape_cast %58 : vector<8x256xf32> to vector<1x8x256xf32>
      %cst_23 = arith.constant dense<0.000000e+00> : vector<1xf32>
      %60 = vector.multi_reduction <add>, %59, %cst_23 [1, 2] : vector<1x8x256xf32> to vector<1xf32>
      %61 = vector.shape_cast %60 : vector<1xf32> to vector<1x1x1xf32>
      %62 = vector.extract %61[0, 0, 0] : f32 from vector<1x1x1xf32>
      %cst_24 = arith.constant 0.00104166672 : f32
      %63 = arith.mulf %62, %cst_24 : f32
      %64 = arith.addf %56, %63 : f32
      %65 = vector.broadcast %64 : f32 to vector<1x1xf32>
      %c0_25 = arith.constant 0 : index
      %c0_26 = arith.constant 0 : index
      %66 = vector.load %arg2[%c0_25, %c0_26] : memref<1x1xf32, #tpu.memory_space<vmem>>, vector<1x1xf32>
      tpu.vector_store %arg2[%c0_25, %c0_26], %65 {strides = array<i32>} : memref<1x1xf32, #tpu.memory_space<vmem>>, vector<1x1xf32>,
    } else {
    }
    return
  }
  func.func @transform_0(%arg0: i32) -> (i32, i32) {
    %c0_i32 = arith.constant 0 : i32
    %c0_i32_0 = arith.constant 0 : i32
    return %arg0, %c0_i32 : i32, i32
  }
  func.func @transform_1(%arg0: i32) -> (i32, i32) {
    %c0_i32 = arith.constant 0 : i32
    %c0_i32_0 = arith.constant 0 : i32
    %c0_i32_1 = arith.constant 0 : i32
    return %c0_i32, %c0_i32_0 : i32, i32
  }
}

</mosaic_0001>

<llo_original>
// kernel: tpu_custom_call.1
$region0: #{tpu_custom_call.1}
  #allocation0 [shape = 'u32[]', space=smem, size = 0x4, offset = 0x4, fixed_abs, tag = 'smem constant byte address 0x4 - core index']
  #allocation1 [shape = 'u32[72,128]{1,0:T(1,128)}', space=vmem, size = 0x9000, scoped, tag = 'internal scratch']
  #allocation2 [shape = 'f32[8,256]{1,0:T(8,128)}', space=vmem, size = 0x2000, scoped, tag = 'scratch operand']
  #allocation3 [shape = 'f32[8,256]{1,0:T(8,128)}', space=vmem, size = 0x2000, scoped, tag = 'scratch operand']
  %s0 = inlined_call_operand.hbm [shape: f32[8,256], index: 0, kind: input, shape index: {}]
  %s1 = inlined_call_operand.hbm [shape: f32[1,1], index: 1, kind: output, shape index: {}]
  %s2 = sld [smem:[#allocation0]]
  $region26: #{tpu_custom_call.1} parent=0
    _
  %s4 = ssub.s32 1, %s2
  %s5 = scalar_select 0, %s4, %s2
  $region1: #{tpu_custom_call.1} parent=0
    #allocation4 [shape = 'u8[8192]{0}', space=vmem, size = 0x2000, scoped, tag = 'input window, operand 0, single buffered']
    #allocation5 [shape = 's32[1]{0}', space=sflag, size = 0x4, scoped, tag = 'scoped memory for tpu_custom_call.1']
    #allocation6 [shape = 's32[1]{0}', space=sflag, size = 0x4, scoped, tag = 'scoped memory for tpu_custom_call.1']
    #allocation7 [shape = 'u8[512]{0}', space=vmem, size = 0x400, scoped, tag = 'output window, operand 0, single buffered']
    %6 = vsyncpa [#allocation5], 0
    %7 = vsyncpa [#allocation6], 0
    // Predicated region
    $region2: #{tpu_custom_call.1} parent=1 // pred_check
      _
    $region3: #{tpu_custom_call.1} parent=1 // pred_check_branch
      %9 = sbr.rel (0) target = $region5
    $region4: #{tpu_custom_call.1} parent=1 // pred_region
      %11 = vsyncadd [#allocation5], 0
      %s13 = sshll.u32 %s0, 4
      %s14 = int_to_ptr.hbm [resolvable:$true] %s13
      %s15 = sshll.u32 [#allocation4], 4
      %s16 = int_to_ptr.vmem [resolvable:$true] %s15
      %18 = dma.hbm_to_vmem [thread:$0]  %s14, 256, %s16, [#allocation5]
    $region5: #{tpu_custom_call.1} parent=1 // pred_fallthru
      _
    // Predicated region
    $region6: #{tpu_custom_call.1} parent=1 // pred_check
      _
    $region7: #{tpu_custom_call.1} parent=1 // pred_check_branch
      %20 = sbr.rel (0) target = $region9
    $region8: #{tpu_custom_call.1} parent=1 // pred_region
      %22 = dma.done [#allocation5], 256
    $region9: #{tpu_custom_call.1} parent=1 // pred_fallthru
      _
    %p23 = scmp.eq.s32.totalorder 0, 0
    // Predicated region
    $region10: #{tpu_custom_call.1} parent=1 // pred_check
      %p24 = pneg %p23
    $region11: #{tpu_custom_call.1} parent=1 // pred_check_branch
      %26 = sbr.rel (%p24) target = $region13
    $region12: #{tpu_custom_call.1} parent=1 // pred_region
      %27 = vst [vmem:[#allocation2] sm:$0xff] 0.0
      %28 = vst [vmem:[#allocation2 + $0x8] sm:$0xff] 0.0
      %29 = vst [vmem:[#allocation3] sm:$0xff] 0.0
      %30 = vst [vmem:[#allocation3 + $0x8] sm:$0xff] 0.0
    $region13: #{tpu_custom_call.1} parent=1 // pred_fallthru
      _
    %s31 = smul.u32 0, 2
    %s32 = smul.addr %s31, 8
    %s33 = scalar_lea.vmem [#allocation4], %s32
    %v34 = vld [vmem:[%s33] sm:$0xff]
    %v35 = vld [vmem:[%s33 + $0x8] sm:$0xff]
    %36 = vrot.lane.b32.xlu0 %v34, 127
    %v37 = vpop.permute.xlu0 %36
    %38 = vrot.lane.b32.xlu0 %v35, 127
    %v39 = vpop.permute.xlu0 %38
    %v40 = vlaneseq
    %v41 = vand.u32 %v40, 127
    %vm42 = vcmp.lt.s32.totalorder %v41, 127
    %v43 = vsel %vm42, %v37, %v39
    %v44 = vsel %vm42, %v39, %v37
    %45 = vrot.lane.b32.xlu0 %v34, 112
    %v46 = vpop.permute.xlu0 %45
    %47 = vrot.lane.b32.xlu0 %v35, 112
    %v48 = vpop.permute.xlu0 %47
    %vm49 = vcmp.lt.s32.totalorder %v41, 112
    %v50 = vsel %vm49, %v46, %v48
    %v51 = vsel %vm49, %v48, %v46
    %v52 = vsub.f32 %v43, %v34
    %v53 = vsub.f32 %v44, %v35
    %v54 = vsub.f32 %v50, %v34
    %v55 = vsub.f32 %v51, %v35
    %v56 = vld [vmem:[#allocation3] sm:$0xff]
    %v57 = vld [vmem:[#allocation3 + $0x8] sm:$0xff]
    %v58 = vmul.f32 %v52, %v52
    %v59 = vmul.f32 %v53, %v53
    %v60 = vadd.f32 %v56, %v58
    %v61 = vadd.f32 %v57, %v59
    %62 = vst [vmem:[#allocation3] sm:$0xff] %v60
    %63 = vst [vmem:[#allocation3 + $0x8] sm:$0xff] %v61
    %v64 = vld [vmem:[#allocation2] sm:$0xff]
    %v65 = vld [vmem:[#allocation2 + $0x8] sm:$0xff]
    %v66 = vmul.f32 %v54, %v54
    %v67 = vmul.f32 %v55, %v55
    %v68 = vadd.f32 %v64, %v66
    %v69 = vadd.f32 %v65, %v67
    %70 = vst [vmem:[#allocation2] sm:$0xff] %v68
    %71 = vst [vmem:[#allocation2 + $0x8] sm:$0xff] %v69
    // Predicated region
    $region14: #{tpu_custom_call.1} parent=1 // pred_check
      %p72 = pneg %p23
    $region15: #{tpu_custom_call.1} parent=1 // pred_check_branch
      %74 = sbr.rel (%p72) target = $region17
    $region16: #{tpu_custom_call.1} parent=1 // pred_region
      %v75 = vadd.s32 %v41, 128
      %vm76 = vcmp.lt.s32.totalorder %v41, 240
      %vm77 = vcmp.lt.s32.totalorder %v75, 240
      %v78 = vsel %vm76, 1, 0
      %v79 = vsel %vm77, 1, 0
      %v80 = vcvt.s32.f32 %v78
      %v81 = vcvt.s32.f32 %v79
      %vm82 = vcmp.lt.s32.totalorder %v41, 0
      %v83 = vsub.s32 0, %v41
      %v84 = vsel %vm82, %v83, %v41
      %v85 = vshrl.u32 %v84, 4
      %v86 = vand.u32 %v84, 15
      %v87 = vsub.s32 0, %v86
      %v88 = vsel %vm82, %v87, %v86
      %vm89 = vcmp.lt.s32.totalorder %v75, 0
      %v90 = vsub.s32 0, %v75
      %v91 = vsel %vm89, %v90, %v75
      %v92 = vshrl.u32 %v91, 4
      %v93 = vand.u32 %v91, 15
      %v94 = vsub.s32 0, %v93
      %v95 = vsel %vm89, %v94, %v93
      %vm96 = vcmp.ne.s32.totalorder %v88, 0
      %vm97 = vcmp.ne.s32.totalorder %v95, 0
      %vm98 = vcmp.lt.s32.totalorder %v88, 0
      %vm99 = vcmp.lt.s32.totalorder %v95, 0
      %vm100 = vmand %vm98, %vm96
      %vm101 = vmand %vm99, %vm97
      %v102 = vadd.s32 %v88, 16
      %v103 = vadd.s32 %v95, 16
      %v104 = vsel %vm100, %v102, %v88
      %v105 = vsel %vm101, %v103, %v95
      %vm106 = vcmp.ne.s32.totalorder %v104, 15
      %vm107 = vcmp.ne.s32.totalorder %v105, 15
      %vm108 = vcmp.lt.s32.totalorder %v41, 256
      %vm109 = vcmp.lt.s32.totalorder %v75, 256
      %vm110 = vmand %vm106, %vm108
      %vm111 = vmand %vm107, %vm109
      %v112 = vsel %vm110, 1, 0
      %v113 = vsel %vm111, 1, 0
      %v114 = vcvt.s32.f32 %v112
      %v115 = vcvt.s32.f32 %v113
      %v116 = vld [vmem:[#allocation2] sm:$0xff]
      %v117 = vld [vmem:[#allocation2 + $0x8] sm:$0xff]
      %v118 = vmul.f32 %v116, %v80
      %v119 = vmul.f32 %v117, %v81
      %v120 = vadd.f32 %v118, %v119
      %121 = vadd.xlane.f32.xlu0 %v120
      %v122 = vpop.xlane.xlu0 %121
      %v123 = vrot.slane %v122, 4
      %v124 = vadd.f32 %v122, %v123
      %v125 = vrot.slane %v124, 2
      %v126 = vadd.f32 %v124, %v125
      %v127 = vrot.slane %v126, 1
      %v128 = vadd.f32 %v126, %v127
      %s129 = vtos %v128
      %s130 = smul.f32 %s129, 0.0010416667
      %v131 = vld [vmem:[#allocation3] sm:$0xff]
      %v132 = vld [vmem:[#allocation3 + $0x8] sm:$0xff]
      %v133 = vmul.f32 %v131, %v114
      %v134 = vmul.f32 %v132, %v115
      %v135 = vadd.f32 %v133, %v134
      %136 = vadd.xlane.f32.xlu0 %v135
      %v137 = vpop.xlane.xlu0 %136
      %v138 = vrot.slane %v137, 4
      %v139 = vadd.f32 %v137, %v138
      %v140 = vrot.slane %v139, 2
      %v141 = vadd.f32 %v139, %v140
      %v142 = vrot.slane %v141, 1
      %v143 = vadd.f32 %v141, %v142
      %s144 = vtos %v143
      %s145 = smul.f32 %s144, 0.0010416667
      %s146 = sadd.f32 %s130, %s145
      %v147 = vstv %s146
      %vm148 = vcmask 0
      %149 = vst.msk [vmem:[#allocation7] sm:$0x1] %vm148, %v147
    $region17: #{tpu_custom_call.1} parent=1 // pred_fallthru
      _
    // Predicated region
    $region18: #{tpu_custom_call.1} parent=1 // pred_check
      _
    $region19: #{tpu_custom_call.1} parent=1 // pred_check_branch
      %151 = sbr.rel (0) target = $region21
    $region20: #{tpu_custom_call.1} parent=1 // pred_region
      %153 = vsyncadd [#allocation6], 0
      %s155 = sshll.u32 [#allocation7], 4
      %s156 = int_to_ptr.vmem [resolvable:$true] %s155
      %s157 = sshll.u32 %s1, 4
      %s158 = int_to_ptr.hbm [resolvable:$true] %s157
      %160 = dma.vmem_to_hbm [thread:$0]  %s156, 16, %s158, [#allocation6]
    $region21: #{tpu_custom_call.1} parent=1 // pred_fallthru
      _
    // Predicated region
    $region22: #{tpu_custom_call.1} parent=1 // pred_check
      _
    $region23: #{tpu_custom_call.1} parent=1 // pred_check_branch
      %162 = sbr.rel (0) target = $region25
    $region24: #{tpu_custom_call.1} parent=1 // pred_region
      %164 = dma.done [#allocation6], 16
    $region25: #{tpu_custom_call.1} parent=1 // pred_fallthru
      _
    %165 = vsyncpa [#allocation5], 1
    %166 = vsyncpa [#allocation6], 1

</llo_original>
